<compile_context>
chip_gen: v7x
topology: tpu7x:2x2x1
jax: 0.10.0
libtpu: 0.0.40
codegen_flags: <defaults>
</compile_context>

<pallas_src>
import jax
import jax.numpy as jnp
import numpy as np
from jax.experimental import pallas as pl
from jax.experimental.pallas import tpu as pltpu


def _bilinear_matrix(out_size: int, in_size: int, scale: float) -> np.ndarray:
    """Interpolation matrix matching PyTorch bilinear upsample, align_corners=False.

    Each row sums to 1 (convex combination), which is what makes the deferred
    bias-add in the kernel exactly equivalent to adding the bias before upsampling.
    """
    A = np.zeros((out_size, in_size), dtype=np.float64)
    for o in range(out_size):
        src = (o + 0.5) / scale - 0.5
        src = max(src, 0.0)                       # PyTorch clamps negative src to 0
        i0 = min(int(np.floor(src)), in_size - 1)
        frac = src - i0
        i1 = min(i0 + 1, in_size - 1)
        A[o, i0] += 1.0 - frac
        A[o, i1] += frac
    return A


def _dsv_up_kernel(x_ref, w_ref, b_ref, awt_ref, ah_ref, out_ref):
    # x_ref  : (N*Cin*H, W)          f32  VMEM  (NCHW x with leading dims pre-merged
    #                                            in the wrapper -- free in HBM)
    # w_ref  : (Cout, Cin)           f32  SMEM  1x1-conv weight (scalar reads)
    # b_ref  : (Cout,)               f32  SMEM  conv bias (added to the f32 result)
    # awt_ref: (W, TILE_WO)          bf16 VMEM  A_w^T column tile (this step's lanes)
    # ah_ref : (Ho, H)               bf16 VMEM  full A_h
    # out_ref: (N, Cout, Ho, TILE_WO) f32 VMEM
    Cout, Cin = w_ref.shape
    Ho, H = ah_ref.shape
    N = out_ref.shape[0]

    # ---- Pass 1: bilinear along W.  All (n, c, h) rows stacked into one GEMM:
    #      M = N*Cin*H (=128 at the toy shape), K = W, lanes = TILE_WO.
    #      In-kernel f32 -> bf16 cast (VPU); f32 accumulation on the MXU.
    x_bf = x_ref[...].astype(jnp.bfloat16)
    s = jnp.dot(x_bf, awt_ref[...],
                preferred_element_type=jnp.float32)           # (N*Cin*H, TILE_WO) f32

    # ---- Pass 2: per (n, cout) -- 1x1-conv channel mix (f32 scalar MACs on the
    #      VPU, SMEM weight scalars) fused with the bilinear-H GEMM on the MXU.
    #      Bias is added to the final f32 accumulator (deferred bias).
    # NOTE: for large Cin/Cout replace the scalar-MAC loop with a per-batch MXU GEMM.
    ah = ah_ref[...]                                          # (Ho, H) bf16
    for n in range(N):                                        # static unroll (tiny N, C)
        s_c = [s[(n * Cin + c) * H:(n * Cin + c + 1) * H, :] for c in range(Cin)]
        for o in range(Cout):
            acc = s_c[0] * w_ref[o, 0]                        # (H, TILE_WO) f32
            for c in range(1, Cin):
                acc = acc + s_c[c] * w_ref[o, c]
            z = jnp.dot(ah, acc.astype(jnp.bfloat16),
                        preferred_element_type=jnp.float32)   # (Ho, TILE_WO) f32
            out_ref[n, o] = (z + b_ref[o]).astype(out_ref.dtype)


def dsv_up_pallas(x_nchw, weight, bias, scale_factor):
    """x_nchw: (N, Cin, H, W); weight: (Cout, Cin, 1, 1); bias: (Cout,). Returns NCHW f32."""
    N, Cin, H, W = x_nchw.shape
    Cout = weight.shape[0]
    Ho, Wo = int(H * scale_factor), int(W * scale_factor)

    # Metadata-only reshapes (contiguous NCHW), no extra HBM passes, no wrapper casts of x.
    x2 = jnp.reshape(x_nchw, (N * Cin * H, W))                     # f32, cast in-kernel
    w_mat = jnp.reshape(weight, (Cout, Cin)).astype(jnp.float32)   # SMEM scalars
    b_vec = jnp.reshape(bias, (Cout,)).astype(jnp.float32)         # SMEM scalars

    # Tiny separable interpolation operands (host precomputed).  For scale_factor=2
    # the weights (0.25/0.75/1.0) are bf16-exact.
    a_h = _bilinear_matrix(Ho, H, float(scale_factor))             # (Ho, H)
    a_w = _bilinear_matrix(Wo, W, float(scale_factor))             # (Wo, W)
    awt = jnp.asarray(a_w.T, dtype=jnp.bfloat16)                   # (W, Wo)
    ah = jnp.asarray(a_h, dtype=jnp.bfloat16)                      # (Ho, H)

    # Lane-axis (Wo) tiling: lane-dense multiples of 128 at real sizes (v7x VMEM fit,
    # 2-TC parallel axis, unmasked stores); toy Wo=32 collapses to a single step.
    if Wo % 256 == 0:
        tile_wo = 256
    elif Wo % 128 == 0:
        tile_wo = 128
    else:
        tile_wo = Wo
    num_tiles = Wo // tile_wo

    # Single-buffer grid-invariant operands once the grid really pipelines (>1 step).
    inv_mode = {}
    if num_tiles > 1 and hasattr(pl, "Buffered"):
        inv_mode = dict(pipeline_mode=pl.Buffered(1))

    cost = pl.CostEstimate(
        flops=int(2 * N * Cin * H * W * Wo                 # W-pass GEMM
                  + 2 * N * Cout * Cin * H * Wo            # channel mix (VPU MACs)
                  + 2 * N * Cout * Ho * H * Wo),           # H-pass GEMM
        transcendentals=0,
        bytes_accessed=int(x2.size * 4 + w_mat.size * 4 + b_vec.size * 4
                           + awt.size * 2 + ah.size * 2
                           + N * Cout * Ho * Wo * 4),
    )

    out = pl.pallas_call(
        _dsv_up_kernel,
        out_shape=jax.ShapeDtypeStruct((N, Cout, Ho, Wo), jnp.float32),
        grid_spec=pltpu.PrefetchScalarGridSpec(
            num_scalar_prefetch=0,
            grid=(num_tiles,),
            in_specs=[
                pl.BlockSpec((N * Cin * H, W), lambda j: (0, 0), **inv_mode),
                pl.BlockSpec(memory_space=pltpu.MemorySpace.SMEM),   # conv weight
                pl.BlockSpec(memory_space=pltpu.MemorySpace.SMEM),   # conv bias
                pl.BlockSpec((W, tile_wo), lambda j: (0, j)),        # A_w^T column tile
                pl.BlockSpec((Ho, H), lambda j: (0, 0), **inv_mode), # A_h (invariant)
            ],
            out_specs=pl.BlockSpec((N, Cout, Ho, tile_wo), lambda j: (0, 0, 0, j)),
        ),
        compiler_params=pltpu.CompilerParams(
            dimension_semantics=("parallel",)),
        cost_estimate=cost,
    )(x2, w_mat, b_vec, awt, ah)

    return out   # already (N, Cout, Ho, Wo) NCHW


def _dsv_up_reference(x_nchw, weight, bias, scale_factor):
    """Pure-JAX f32 reference (same interpolation matrices) for a sanity check."""
    N, Cin, H, W = x_nchw.shape
    Cout = weight.shape[0]
    Ho, Wo = int(H * scale_factor), int(W * scale_factor)
    w_mat = jnp.reshape(weight, (Cout, Cin)).astype(jnp.float32)
    a_h = jnp.asarray(_bilinear_matrix(Ho, H, float(scale_factor)), dtype=jnp.float32)
    a_w = jnp.asarray(_bilinear_matrix(Wo, W, float(scale_factor)), dtype=jnp.float32)
    y = jnp.einsum('oi,nihw->nohw', w_mat, x_nchw.astype(jnp.float32))
    y = y + bias.astype(jnp.float32)[None, :, None, None]
    t = jnp.einsum('ph,nchw->ncpw', a_h, y)
    return jnp.einsum('qw,ncpw->ncpq', a_w, t)


if __name__ == "__main__":
    # Dsv_UP(in_size=4, out_size=4, scale_factor=2) at small shapes.
    N, Cin, H, W = 2, 4, 16, 16
    Cout = 4
    scale_factor = 2

    key = jax.random.PRNGKey(0)
    kx, kw, kb = jax.random.split(key, 3)
    x = jax.random.normal(kx, (N, Cin, H, W), dtype=jnp.float32)
    # deterministic synthetic Conv2d(1x1) parameters (shapes from nn.Conv2d)
    weight = jax.random.normal(kw, (Cout, Cin, 1, 1), dtype=jnp.float32) * 0.1
    bias = jax.random.normal(kb, (Cout,), dtype=jnp.float32) * 0.1

    out = dsv_up_pallas(x, weight, bias, scale_factor)
    jax.block_until_ready(out)
    assert out.shape == (N, Cout, H * scale_factor, W * scale_factor)

    ref = _dsv_up_reference(x, weight, bias, scale_factor)
    np.testing.assert_allclose(np.asarray(out), np.asarray(ref), rtol=2e-2, atol=2e-2)
    print("KERNEL_OK")
</pallas_src>

<mosaic_0001>
module attributes {stable_mosaic.version = 11 : i64} {
  func.func @_dsv_up_kernel(%arg0: i32, %arg1: memref<128x16xf32, #tpu.memory_space<vmem>>, %arg2: memref<4x4xf32, #tpu.memory_space<smem>>, %arg3: memref<4xf32, #tpu.memory_space<smem>>, %arg4: memref<16x32xbf16, #tpu.memory_space<vmem>>, %arg5: memref<32x16xbf16, #tpu.memory_space<vmem>>, %arg6: memref<2x4x32x32xf32, #tpu.memory_space<vmem>>) attributes {dimension_semantics = [#tpu.dimension_semantics<parallel>], iteration_bounds = array<i64: 1>, scalar_prefetch = 0 : i64, scratch_operands = 0 : i64, tpu.core_type = #tpu.core_type<tc>, window_params = [{pipeline_mode = #tpu.pipeline_mode<synchronous>, transform_indices = @transform_0, window_bounds = array<i64: 128, 16>}, {transform_indices = @transform_1, window_bounds = array<i64: 4, 4>}, {transform_indices = @transform_2, window_bounds = array<i64: 4>}, {transform_indices = @transform_3, window_bounds = array<i64: 16, 32>}, {pipeline_mode = #tpu.pipeline_mode<synchronous>, transform_indices = @transform_4, window_bounds = array<i64: 32, 16>}, {transform_indices = @transform_5, window_bounds = array<i64: 2, 4, 32, 32>}]} {
    %c0 = arith.constant 0 : index
    %c0_0 = arith.constant 0 : index
    %0 = vector.load %arg1[%c0, %c0_0] : memref<128x16xf32, #tpu.memory_space<vmem>>, vector<128x16xf32>
    %1 = arith.truncf %0 : vector<128x16xf32> to vector<128x16xbf16>
    %c0_1 = arith.constant 0 : index
    %c0_2 = arith.constant 0 : index
    %2 = vector.load %arg4[%c0_1, %c0_2] : memref<16x32xbf16, #tpu.memory_space<vmem>>, vector<16x32xbf16>
    %cst = arith.constant dense<0.000000e+00> : vector<128x32xf32>
    %3 = tpu.matmul %1, %2, %cst {dimension_numbers = #tpu.dot_dimension_numbers<[1], [0], [0], [1], [0, 0, 1, 1], [], []>} : vector<128x16xbf16>, vector<16x32xbf16>, vector<128x32xf32> -> vector<128x32xf32>
    %c0_3 = arith.constant 0 : index
    %c0_4 = arith.constant 0 : index
    %4 = vector.load %arg5[%c0_3, %c0_4] : memref<32x16xbf16, #tpu.memory_space<vmem>>, vector<32x16xbf16>
    %5 = vector.extract_strided_slice %3 {offsets = [0, 0], sizes = [16, 32], strides = [1, 1]} : vector<128x32xf32> to vector<16x32xf32>
    %6 = vector.extract_strided_slice %3 {offsets = [16, 0], sizes = [16, 32], strides = [1, 1]} : vector<128x32xf32> to vector<16x32xf32>
    %7 = vector.extract_strided_slice %3 {offsets = [32, 0], sizes = [16, 32], strides = [1, 1]} : vector<128x32xf32> to vector<16x32xf32>
    %8 = vector.extract_strided_slice %3 {offsets = [48, 0], sizes = [16, 32], strides = [1, 1]} : vector<128x32xf32> to vector<16x32xf32>
    %c0_5 = arith.constant 0 : index
    %c0_6 = arith.constant 0 : index
    %9 = memref.load %arg2[%c0_5, %c0_6] : memref<4x4xf32, #tpu.memory_space<smem>>
    %10 = vector.broadcast %9 : f32 to vector<16x32xf32>
    %11 = arith.mulf %5, %10 : vector<16x32xf32>
    %c0_7 = arith.constant 0 : index
    %c1 = arith.constant 1 : index
    %12 = memref.load %arg2[%c0_7, %c1] : memref<4x4xf32, #tpu.memory_space<smem>>
    %13 = vector.broadcast %12 : f32 to vector<16x32xf32>
    %14 = arith.mulf %6, %13 : vector<16x32xf32>
    %15 = arith.addf %11, %14 : vector<16x32xf32>
    %c0_8 = arith.constant 0 : index
    %c2 = arith.constant 2 : index
    %16 = memref.load %arg2[%c0_8, %c2] : memref<4x4xf32, #tpu.memory_space<smem>>
    %17 = vector.broadcast %16 : f32 to vector<16x32xf32>
    %18 = arith.mulf %7, %17 : vector<16x32xf32>
    %19 = arith.addf %15, %18 : vector<16x32xf32>
    %c0_9 = arith.constant 0 : index
    %c3 = arith.constant 3 : index
    %20 = memref.load %arg2[%c0_9, %c3] : memref<4x4xf32, #tpu.memory_space<smem>>
    %21 = vector.broadcast %20 : f32 to vector<16x32xf32>
    %22 = arith.mulf %8, %21 : vector<16x32xf32>
    %23 = arith.addf %19, %22 : vector<16x32xf32>
    %24 = arith.truncf %23 : vector<16x32xf32> to vector<16x32xbf16>
    %cst_10 = arith.constant dense<0.000000e+00> : vector<32x32xf32>
    %25 = tpu.matmul %4, %24, %cst_10 {dimension_numbers = #tpu.dot_dimension_numbers<[1], [0], [0], [1], [0, 0, 1, 1], [], []>} : vector<32x16xbf16>, vector<16x32xbf16>, vector<32x32xf32> -> vector<32x32xf32>
    %c0_11 = arith.constant 0 : index
    %26 = memref.load %arg3[%c0_11] : memref<4xf32, #tpu.memory_space<smem>>
    %27 = vector.broadcast %26 : f32 to vector<32x32xf32>
    %28 = arith.addf %25, %27 : vector<32x32xf32>
    %c0_12 = arith.constant 0 : index
    %c0_13 = arith.constant 0 : index
    %c0_14 = arith.constant 0 : index
    %c0_15 = arith.constant 0 : index
    %29 = vector.load %arg6[%c0_12, %c0_13, %c0_14, %c0_15] : memref<2x4x32x32xf32, #tpu.memory_space<vmem>>, vector<1x1x32x32xf32>
    %30 = vector.shape_cast %29 : vector<1x1x32x32xf32> to vector<32x32xf32>
    %31 = vector.shape_cast %28 : vector<32x32xf32> to vector<1x1x32x32xf32>
    tpu.vector_store %arg6[%c0_12, %c0_13, %c0_14, %c0_15], %31 {strides = array<i32>} : memref<2x4x32x32xf32, #tpu.memory_space<vmem>>, vector<1x1x32x32xf32>,
    %c1_16 = arith.constant 1 : index
    %c0_17 = arith.constant 0 : index
    %32 = memref.load %arg2[%c1_16, %c0_17] : memref<4x4xf32, #tpu.memory_space<smem>>
    %33 = vector.broadcast %32 : f32 to vector<16x32xf32>
    %34 = arith.mulf %5, %33 : vector<16x32xf32>
    %c1_18 = arith.constant 1 : index
    %c1_19 = arith.constant 1 : index
    %35 = memref.load %arg2[%c1_18, %c1_19] : memref<4x4xf32, #tpu.memory_space<smem>>
    %36 = vector.broadcast %35 : f32 to vector<16x32xf32>
    %37 = arith.mulf %6, %36 : vector<16x32xf32>
    %38 = arith.addf %34, %37 : vector<16x32xf32>
    %c1_20 = arith.constant 1 : index
    %c2_21 = arith.constant 2 : index
    %39 = memref.load %arg2[%c1_20, %c2_21] : memref<4x4xf32, #tpu.memory_space<smem>>
    %40 = vector.broadcast %39 : f32 to vector<16x32xf32>
    %41 = arith.mulf %7, %40 : vector<16x32xf32>
    %42 = arith.addf %38, %41 : vector<16x32xf32>
    %c1_22 = arith.constant 1 : index
    %c3_23 = arith.constant 3 : index
    %43 = memref.load %arg2[%c1_22, %c3_23] : memref<4x4xf32, #tpu.memory_space<smem>>
    %44 = vector.broadcast %43 : f32 to vector<16x32xf32>
    %45 = arith.mulf %8, %44 : vector<16x32xf32>
    %46 = arith.addf %42, %45 : vector<16x32xf32>
    %47 = arith.truncf %46 : vector<16x32xf32> to vector<16x32xbf16>
    %cst_24 = arith.constant dense<0.000000e+00> : vector<32x32xf32>
    %48 = tpu.matmul %4, %47, %cst_24 {dimension_numbers = #tpu.dot_dimension_numbers<[1], [0], [0], [1], [0, 0, 1, 1], [], []>} : vector<32x16xbf16>, vector<16x32xbf16>, vector<32x32xf32> -> vector<32x32xf32>
    %c1_25 = arith.constant 1 : index
    %49 = memref.load %arg3[%c1_25] : memref<4xf32, #tpu.memory_space<smem>>
    %50 = vector.broadcast %49 : f32 to vector<32x32xf32>
    %51 = arith.addf %48, %50 : vector<32x32xf32>
    %c0_26 = arith.constant 0 : index
    %c1_27 = arith.constant 1 : index
    %c0_28 = arith.constant 0 : index
    %c0_29 = arith.constant 0 : index
    %52 = vector.load %arg6[%c0_26, %c1_27, %c0_28, %c0_29] : memref<2x4x32x32xf32, #tpu.memory_space<vmem>>, vector<1x1x32x32xf32>
    %53 = vector.shape_cast %52 : vector<1x1x32x32xf32> to vector<32x32xf32>
    %54 = vector.shape_cast %51 : vector<32x32xf32> to vector<1x1x32x32xf32>
    tpu.vector_store %arg6[%c0_26, %c1_27, %c0_28, %c0_29], %54 {strides = array<i32>} : memref<2x4x32x32xf32, #tpu.memory_space<vmem>>, vector<1x1x32x32xf32>,
    %c2_30 = arith.constant 2 : index
    %c0_31 = arith.constant 0 : index
    %55 = memref.load %arg2[%c2_30, %c0_31] : memref<4x4xf32, #tpu.memory_space<smem>>
    %56 = vector.broadcast %55 : f32 to vector<16x32xf32>
    %57 = arith.mulf %5, %56 : vector<16x32xf32>
    %c2_32 = arith.constant 2 : index
    %c1_33 = arith.constant 1 : index
    %58 = memref.load %arg2[%c2_32, %c1_33] : memref<4x4xf32, #tpu.memory_space<smem>>
    %59 = vector.broadcast %58 : f32 to vector<16x32xf32>
    %60 = arith.mulf %6, %59 : vector<16x32xf32>
    %61 = arith.addf %57, %60 : vector<16x32xf32>
    %c2_34 = arith.constant 2 : index
    %c2_35 = arith.constant 2 : index
    %62 = memref.load %arg2[%c2_34, %c2_35] : memref<4x4xf32, #tpu.memory_space<smem>>
    %63 = vector.broadcast %62 : f32 to vector<16x32xf32>
    %64 = arith.mulf %7, %63 : vector<16x32xf32>
    %65 = arith.addf %61, %64 : vector<16x32xf32>
    %c2_36 = arith.constant 2 : index
    %c3_37 = arith.constant 3 : index
    %66 = memref.load %arg2[%c2_36, %c3_37] : memref<4x4xf32, #tpu.memory_space<smem>>
    %67 = vector.broadcast %66 : f32 to vector<16x32xf32>
    %68 = arith.mulf %8, %67 : vector<16x32xf32>
    %69 = arith.addf %65, %68 : vector<16x32xf32>
    %70 = arith.truncf %69 : vector<16x32xf32> to vector<16x32xbf16>
    %cst_38 = arith.constant dense<0.000000e+00> : vector<32x32xf32>
    %71 = tpu.matmul %4, %70, %cst_38 {dimension_numbers = #tpu.dot_dimension_numbers<[1], [0], [0], [1], [0, 0, 1, 1], [], []>} : vector<32x16xbf16>, vector<16x32xbf16>, vector<32x32xf32> -> vector<32x32xf32>
    %c2_39 = arith.constant 2 : index
    %72 = memref.load %arg3[%c2_39] : memref<4xf32, #tpu.memory_space<smem>>
    %73 = vector.broadcast %72 : f32 to vector<32x32xf32>
    %74 = arith.addf %71, %73 : vector<32x32xf32>
    %c0_40 = arith.constant 0 : index
    %c2_41 = arith.constant 2 : index
    %c0_42 = arith.constant 0 : index
    %c0_43 = arith.constant 0 : index
    %75 = vector.load %arg6[%c0_40, %c2_41, %c0_42, %c0_43] : memref<2x4x32x32xf32, #tpu.memory_space<vmem>>, vector<1x1x32x32xf32>
    %76 = vector.shape_cast %75 : vector<1x1x32x32xf32> to vector<32x32xf32>
    %77 = vector.shape_cast %74 : vector<32x32xf32> to vector<1x1x32x32xf32>
    tpu.vector_store %arg6[%c0_40, %c2_41, %c0_42, %c0_43], %77 {strides = array<i32>} : memref<2x4x32x32xf32, #tpu.memory_space<vmem>>, vector<1x1x32x32xf32>,
    %c3_44 = arith.constant 3 : index
    %c0_45 = arith.constant 0 : index
    %78 = memref.load %arg2[%c3_44, %c0_45] : memref<4x4xf32, #tpu.memory_space<smem>>
    %79 = vector.broadcast %78 : f32 to vector<16x32xf32>
    %80 = arith.mulf %5, %79 : vector<16x32xf32>
    %c3_46 = arith.constant 3 : index
    %c1_47 = arith.constant 1 : index
    %81 = memref.load %arg2[%c3_46, %c1_47] : memref<4x4xf32, #tpu.memory_space<smem>>
    %82 = vector.broadcast %81 : f32 to vector<16x32xf32>
    %83 = arith.mulf %6, %82 : vector<16x32xf32>
    %84 = arith.addf %80, %83 : vector<16x32xf32>
    %c3_48 = arith.constant 3 : index
    %c2_49 = arith.constant 2 : index
    %85 = memref.load %arg2[%c3_48, %c2_49] : memref<4x4xf32, #tpu.memory_space<smem>>
    %86 = vector.broadcast %85 : f32 to vector<16x32xf32>
    %87 = arith.mulf %7, %86 : vector<16x32xf32>
    %88 = arith.addf %84, %87 : vector<16x32xf32>
    %c3_50 = arith.constant 3 : index
    %c3_51 = arith.constant 3 : index
    %89 = memref.load %arg2[%c3_50, %c3_51] : memref<4x4xf32, #tpu.memory_space<smem>>
    %90 = vector.broadcast %89 : f32 to vector<16x32xf32>
    %91 = arith.mulf %8, %90 : vector<16x32xf32>
    %92 = arith.addf %88, %91 : vector<16x32xf32>
    %93 = arith.truncf %92 : vector<16x32xf32> to vector<16x32xbf16>
    %cst_52 = arith.constant dense<0.000000e+00> : vector<32x32xf32>
    %94 = tpu.matmul %4, %93, %cst_52 {dimension_numbers = #tpu.dot_dimension_numbers<[1], [0], [0], [1], [0, 0, 1, 1], [], []>} : vector<32x16xbf16>, vector<16x32xbf16>, vector<32x32xf32> -> vector<32x32xf32>
    %c3_53 = arith.constant 3 : index
    %95 = memref.load %arg3[%c3_53] : memref<4xf32, #tpu.memory_space<smem>>
    %96 = vector.broadcast %95 : f32 to vector<32x32xf32>
    %97 = arith.addf %94, %96 : vector<32x32xf32>
    %c0_54 = arith.constant 0 : index
    %c3_55 = arith.constant 3 : index
    %c0_56 = arith.constant 0 : index
    %c0_57 = arith.constant 0 : index
    %98 = vector.load %arg6[%c0_54, %c3_55, %c0_56, %c0_57] : memref<2x4x32x32xf32, #tpu.memory_space<vmem>>, vector<1x1x32x32xf32>
    %99 = vector.shape_cast %98 : vector<1x1x32x32xf32> to vector<32x32xf32>
    %100 = vector.shape_cast %97 : vector<32x32xf32> to vector<1x1x32x32xf32>
    tpu.vector_store %arg6[%c0_54, %c3_55, %c0_56, %c0_57], %100 {strides = array<i32>} : memref<2x4x32x32xf32, #tpu.memory_space<vmem>>, vector<1x1x32x32xf32>,
    %101 = vector.extract_strided_slice %3 {offsets = [64, 0], sizes = [16, 32], strides = [1, 1]} : vector<128x32xf32> to vector<16x32xf32>
    %102 = vector.extract_strided_slice %3 {offsets = [80, 0], sizes = [16, 32], strides = [1, 1]} : vector<128x32xf32> to vector<16x32xf32>
    %103 = vector.extract_strided_slice %3 {offsets = [96, 0], sizes = [16, 32], strides = [1, 1]} : vector<128x32xf32> to vector<16x32xf32>
    %104 = vector.extract_strided_slice %3 {offsets = [112, 0], sizes = [16, 32], strides = [1, 1]} : vector<128x32xf32> to vector<16x32xf32>
    %c0_58 = arith.constant 0 : index
    %c0_59 = arith.constant 0 : index
    %105 = memref.load %arg2[%c0_58, %c0_59] : memref<4x4xf32, #tpu.memory_space<smem>>
    %106 = vector.broadcast %105 : f32 to vector<16x32xf32>
    %107 = arith.mulf %101, %106 : vector<16x32xf32>
    %c0_60 = arith.constant 0 : index
    %c1_61 = arith.constant 1 : index
    %108 = memref.load %arg2[%c0_60, %c1_61] : memref<4x4xf32, #tpu.memory_space<smem>>
    %109 = vector.broadcast %108 : f32 to vector<16x32xf32>
    %110 = arith.mulf %102, %109 : vector<16x32xf32>
    %111 = arith.addf %107, %110 : vector<16x32xf32>
    %c0_62 = arith.constant 0 : index
    %c2_63 = arith.constant 2 : index
    %112 = memref.load %arg2[%c0_62, %c2_63] : memref<4x4xf32, #tpu.memory_space<smem>>
    %113 = vector.broadcast %112 : f32 to vector<16x32xf32>
    %114 = arith.mulf %103, %113 : vector<16x32xf32>
    %115 = arith.addf %111, %114 : vector<16x32xf32>
    %c0_64 = arith.constant 0 : index
    %c3_65 = arith.constant 3 : index
    %116 = memref.load %arg2[%c0_64, %c3_65] : memref<4x4xf32, #tpu.memory_space<smem>>
    %117 = vector.broadcast %116 : f32 to vector<16x32xf32>
    %118 = arith.mulf %104, %117 : vector<16x32xf32>
    %119 = arith.addf %115, %118 : vector<16x32xf32>
    %120 = arith.truncf %119 : vector<16x32xf32> to vector<16x32xbf16>
    %cst_66 = arith.constant dense<0.000000e+00> : vector<32x32xf32>
    %121 = tpu.matmul %4, %120, %cst_66 {dimension_numbers = #tpu.dot_dimension_numbers<[1], [0], [0], [1], [0, 0, 1, 1], [], []>} : vector<32x16xbf16>, vector<16x32xbf16>, vector<32x32xf32> -> vector<32x32xf32>
    %c0_67 = arith.constant 0 : index
    %122 = memref.load %arg3[%c0_67] : memref<4xf32, #tpu.memory_space<smem>>
    %123 = vector.broadcast %122 : f32 to vector<32x32xf32>
    %124 = arith.addf %121, %123 : vector<32x32xf32>
    %c1_68 = arith.constant 1 : index
    %c0_69 = arith.constant 0 : index
    %c0_70 = arith.constant 0 : index
    %c0_71 = arith.constant 0 : index
    %125 = vector.load %arg6[%c1_68, %c0_69, %c0_70, %c0_71] : memref<2x4x32x32xf32, #tpu.memory_space<vmem>>, vector<1x1x32x32xf32>
    %126 = vector.shape_cast %125 : vector<1x1x32x32xf32> to vector<32x32xf32>
    %127 = vector.shape_cast %124 : vector<32x32xf32> to vector<1x1x32x32xf32>
    tpu.vector_store %arg6[%c1_68, %c0_69, %c0_70, %c0_71], %127 {strides = array<i32>} : memref<2x4x32x32xf32, #tpu.memory_space<vmem>>, vector<1x1x32x32xf32>,
    %c1_72 = arith.constant 1 : index
    %c0_73 = arith.constant 0 : index
    %128 = memref.load %arg2[%c1_72, %c0_73] : memref<4x4xf32, #tpu.memory_space<smem>>
    %129 = vector.broadcast %128 : f32 to vector<16x32xf32>
    %130 = arith.mulf %101, %129 : vector<16x32xf32>
    %c1_74 = arith.constant 1 : index
    %c1_75 = arith.constant 1 : index
    %131 = memref.load %arg2[%c1_74, %c1_75] : memref<4x4xf32, #tpu.memory_space<smem>>
    %132 = vector.broadcast %131 : f32 to vector<16x32xf32>
    %133 = arith.mulf %102, %132 : vector<16x32xf32>
    %134 = arith.addf %130, %133 : vector<16x32xf32>
    %c1_76 = arith.constant 1 : index
    %c2_77 = arith.constant 2 : index
    %135 = memref.load %arg2[%c1_76, %c2_77] : memref<4x4xf32, #tpu.memory_space<smem>>
    %136 = vector.broadcast %135 : f32 to vector<16x32xf32>
    %137 = arith.mulf %103, %136 : vector<16x32xf32>
    %138 = arith.addf %134, %137 : vector<16x32xf32>
    %c1_78 = arith.constant 1 : index
    %c3_79 = arith.constant 3 : index
    %139 = memref.load %arg2[%c1_78, %c3_79] : memref<4x4xf32, #tpu.memory_space<smem>>
    %140 = vector.broadcast %139 : f32 to vector<16x32xf32>
    %141 = arith.mulf %104, %140 : vector<16x32xf32>
    %142 = arith.addf %138, %141 : vector<16x32xf32>
    %143 = arith.truncf %142 : vector<16x32xf32> to vector<16x32xbf16>
    %cst_80 = arith.constant dense<0.000000e+00> : vector<32x32xf32>
    %144 = tpu.matmul %4, %143, %cst_80 {dimension_numbers = #tpu.dot_dimension_numbers<[1], [0], [0], [1], [0, 0, 1, 1], [], []>} : vector<32x16xbf16>, vector<16x32xbf16>, vector<32x32xf32> -> vector<32x32xf32>
    %c1_81 = arith.constant 1 : index
    %145 = memref.load %arg3[%c1_81] : memref<4xf32, #tpu.memory_space<smem>>
    %146 = vector.broadcast %145 : f32 to vector<32x32xf32>
    %147 = arith.addf %144, %146 : vector<32x32xf32>
    %c1_82 = arith.constant 1 : index
    %c1_83 = arith.constant 1 : index
    %c0_84 = arith.constant 0 : index
    %c0_85 = arith.constant 0 : index
    %148 = vector.load %arg6[%c1_82, %c1_83, %c0_84, %c0_85] : memref<2x4x32x32xf32, #tpu.memory_space<vmem>>, vector<1x1x32x32xf32>
    %149 = vector.shape_cast %148 : vector<1x1x32x32xf32> to vector<32x32xf32>
    %150 = vector.shape_cast %147 : vector<32x32xf32> to vector<1x1x32x32xf32>
    tpu.vector_store %arg6[%c1_82, %c1_83, %c0_84, %c0_85], %150 {strides = array<i32>} : memref<2x4x32x32xf32, #tpu.memory_space<vmem>>, vector<1x1x32x32xf32>,
    %c2_86 = arith.constant 2 : index
    %c0_87 = arith.constant 0 : index
    %151 = memref.load %arg2[%c2_86, %c0_87] : memref<4x4xf32, #tpu.memory_space<smem>>
    %152 = vector.broadcast %151 : f32 to vector<16x32xf32>
    %153 = arith.mulf %101, %152 : vector<16x32xf32>
    %c2_88 = arith.constant 2 : index
    %c1_89 = arith.constant 1 : index
    %154 = memref.load %arg2[%c2_88, %c1_89] : memref<4x4xf32, #tpu.memory_space<smem>>
    %155 = vector.broadcast %154 : f32 to vector<16x32xf32>
    %156 = arith.mulf %102, %155 : vector<16x32xf32>
    %157 = arith.addf %153, %156 : vector<16x32xf32>
    %c2_90 = arith.constant 2 : index
    %c2_91 = arith.constant 2 : index
    %158 = memref.load %arg2[%c2_90, %c2_91] : memref<4x4xf32, #tpu.memory_space<smem>>
    %159 = vector.broadcast %158 : f32 to vector<16x32xf32>
    %160 = arith.mulf %103, %159 : vector<16x32xf32>
    %161 = arith.addf %157, %160 : vector<16x32xf32>
    %c2_92 = arith.constant 2 : index
    %c3_93 = arith.constant 3 : index
    %162 = memref.load %arg2[%c2_92, %c3_93] : memref<4x4xf32, #tpu.memory_space<smem>>
    %163 = vector.broadcast %162 : f32 to vector<16x32xf32>
    %164 = arith.mulf %104, %163 : vector<16x32xf32>
    %165 = arith.addf %161, %164 : vector<16x32xf32>
    %166 = arith.truncf %165 : vector<16x32xf32> to vector<16x32xbf16>
    %cst_94 = arith.constant dense<0.000000e+00> : vector<32x32xf32>
    %167 = tpu.matmul %4, %166, %cst_94 {dimension_numbers = #tpu.dot_dimension_numbers<[1], [0], [0], [1], [0, 0, 1, 1], [], []>} : vector<32x16xbf16>, vector<16x32xbf16>, vector<32x32xf32> -> vector<32x32xf32>
    %c2_95 = arith.constant 2 : index
    %168 = memref.load %arg3[%c2_95] : memref<4xf32, #tpu.memory_space<smem>>
    %169 = vector.broadcast %168 : f32 to vector<32x32xf32>
    %170 = arith.addf %167, %169 : vector<32x32xf32>
    %c1_96 = arith.constant 1 : index
    %c2_97 = arith.constant 2 : index
    %c0_98 = arith.constant 0 : index
    %c0_99 = arith.constant 0 : index
    %171 = vector.load %arg6[%c1_96, %c2_97, %c0_98, %c0_99] : memref<2x4x32x32xf32, #tpu.memory_space<vmem>>, vector<1x1x32x32xf32>
    %172 = vector.shape_cast %171 : vector<1x1x32x32xf32> to vector<32x32xf32>
    %173 = vector.shape_cast %170 : vector<32x32xf32> to vector<1x1x32x32xf32>
    tpu.vector_store %arg6[%c1_96, %c2_97, %c0_98, %c0_99], %173 {strides = array<i32>} : memref<2x4x32x32xf32, #tpu.memory_space<vmem>>, vector<1x1x32x32xf32>,
    %c3_100 = arith.constant 3 : index
    %c0_101 = arith.constant 0 : index
    %174 = memref.load %arg2[%c3_100, %c0_101] : memref<4x4xf32, #tpu.memory_space<smem>>
    %175 = vector.broadcast %174 : f32 to vector<16x32xf32>
    %176 = arith.mulf %101, %175 : vector<16x32xf32>
    %c3_102 = arith.constant 3 : index
    %c1_103 = arith.constant 1 : index
    %177 = memref.load %arg2[%c3_102, %c1_103] : memref<4x4xf32, #tpu.memory_space<smem>>
    %178 = vector.broadcast %177 : f32 to vector<16x32xf32>
    %179 = arith.mulf %102, %178 : vector<16x32xf32>
    %180 = arith.addf %176, %179 : vector<16x32xf32>
    %c3_104 = arith.constant 3 : index
    %c2_105 = arith.constant 2 : index
    %181 = memref.load %arg2[%c3_104, %c2_105] : memref<4x4xf32, #tpu.memory_space<smem>>
    %182 = vector.broadcast %181 : f32 to vector<16x32xf32>
    %183 = arith.mulf %103, %182 : vector<16x32xf32>
    %184 = arith.addf %180, %183 : vector<16x32xf32>
    %c3_106 = arith.constant 3 : index
    %c3_107 = arith.constant 3 : index
    %185 = memref.load %arg2[%c3_106, %c3_107] : memref<4x4xf32, #tpu.memory_space<smem>>
    %186 = vector.broadcast %185 : f32 to vector<16x32xf32>
    %187 = arith.mulf %104, %186 : vector<16x32xf32>
    %188 = arith.addf %184, %187 : vector<16x32xf32>
    %189 = arith.truncf %188 : vector<16x32xf32> to vector<16x32xbf16>
    %cst_108 = arith.constant dense<0.000000e+00> : vector<32x32xf32>
    %190 = tpu.matmul %4, %189, %cst_108 {dimension_numbers = #tpu.dot_dimension_numbers<[1], [0], [0], [1], [0, 0, 1, 1], [], []>} : vector<32x16xbf16>, vector<16x32xbf16>, vector<32x32xf32> -> vector<32x32xf32>
    %c3_109 = arith.constant 3 : index
    %191 = memref.load %arg3[%c3_109] : memref<4xf32, #tpu.memory_space<smem>>
    %192 = vector.broadcast %191 : f32 to vector<32x32xf32>
    %193 = arith.addf %190, %192 : vector<32x32xf32>
    %c1_110 = arith.constant 1 : index
    %c3_111 = arith.constant 3 : index
    %c0_112 = arith.constant 0 : index
    %c0_113 = arith.constant 0 : index
    %194 = vector.load %arg6[%c1_110, %c3_111, %c0_112, %c0_113] : memref<2x4x32x32xf32, #tpu.memory_space<vmem>>, vector<1x1x32x32xf32>
    %195 = vector.shape_cast %194 : vector<1x1x32x32xf32> to vector<32x32xf32>
    %196 = vector.shape_cast %193 : vector<32x32xf32> to vector<1x1x32x32xf32>
    tpu.vector_store %arg6[%c1_110, %c3_111, %c0_112, %c0_113], %196 {strides = array<i32>} : memref<2x4x32x32xf32, #tpu.memory_space<vmem>>, vector<1x1x32x32xf32>,
    return
  }
  func.func @transform_0(%arg0: i32) -> (i32, i32) {
    %c0_i32 = arith.constant 0 : i32
    %c0_i32_0 = arith.constant 0 : i32
    %c0_i32_1 = arith.constant 0 : i32
    return %c0_i32, %c0_i32_0 : i32, i32
  }
  func.func @transform_1(%arg0: i32) -> (i32, i32) {
    %c0_i32 = arith.constant 0 : i32
    %c0_i32_0 = arith.constant 0 : i32
    %c0_i32_1 = arith.constant 0 : i32
    return %c0_i32, %c0_i32_0 : i32, i32
  }
  func.func @transform_2(%arg0: i32) -> i32 {
    %c0_i32 = arith.constant 0 : i32
    %c0_i32_0 = arith.constant 0 : i32
    return %c0_i32 : i32
  }
  func.func @transform_3(%arg0: i32) -> (i32, i32) {
    %c0_i32 = arith.constant 0 : i32
    %c0_i32_0 = arith.constant 0 : i32
    return %c0_i32, %arg0 : i32, i32
  }
  func.func @transform_4(%arg0: i32) -> (i32, i32) {
    %c0_i32 = arith.constant 0 : i32
    %c0_i32_0 = arith.constant 0 : i32
    %c0_i32_1 = arith.constant 0 : i32
    return %c0_i32, %c0_i32_0 : i32, i32
  }
  func.func @transform_5(%arg0: i32) -> (i32, i32, i32, i32) {
    %c0_i32 = arith.constant 0 : i32
    %c0_i32_0 = arith.constant 0 : i32
    %c0_i32_1 = arith.constant 0 : i32
    %c0_i32_2 = arith.constant 0 : i32
    return %c0_i32, %c0_i32_0, %c0_i32_1, %arg0 : i32, i32, i32, i32
  }
}

</mosaic_0001>

<llo_original>
// kernel: tpu_custom_call.1
$region0: #{tpu_custom_call.1}
  #allocation0 [shape = 'u32[]', space=smem, size = 0x4, offset = 0x4, fixed_abs, tag = 'smem constant byte address 0x4 - core index']
  #allocation1 [shape = 'u32[144,128]{1,0:T(1,128)}', space=vmem, size = 0x12000, scoped, tag = 'internal scratch']
  %s0 = inlined_call_operand.vmem [shape: f32[128,16], index: 0, kind: input, shape index: {}]
  %s1 = inlined_call_operand.vmem [shape: f32[4,4], index: 1, kind: input, shape index: {}]
  %s2 = inlined_call_operand.vmem [shape: f32[4], index: 2, kind: input, shape index: {}]
  %s3 = inlined_call_operand.vmem [shape: bf16[16,32], index: 3, kind: input, shape index: {}]
  %s4 = inlined_call_operand.vmem [shape: bf16[32,16], index: 4, kind: input, shape index: {}]
  %s5 = inlined_call_operand.hbm [shape: f32[2,4,32,32], index: 5, kind: output, shape index: {}]
  %s6 = sld [smem:[#allocation0]]
  $region38: #{tpu_custom_call.1} parent=0
    _
  %s8 = ssub.s32 1, %s6
  %s9 = scalar_select 0, %s8, %s6
  $region1: #{tpu_custom_call.1} parent=0
    #allocation2 [shape = 'u8[2048]{0}', space=smem, size = 0x800, scoped, tag = 'input window, operand 1, single buffered']
    #allocation3 [shape = 's32[1]{0}', space=sflag, size = 0x4, scoped, tag = 'scoped memory for tpu_custom_call.1']
    #allocation4 [shape = 's32[1]{0}', space=sflag, size = 0x4, scoped, tag = 'scoped memory for tpu_custom_call.1']
    #allocation5 [shape = 'u8[512]{0}', space=smem, size = 0x200, scoped, tag = 'input window, operand 2, single buffered']
    #allocation6 [shape = 's32[1]{0}', space=sflag, size = 0x4, scoped, tag = 'scoped memory for tpu_custom_call.1']
    #allocation7 [shape = 'u8[131072]{0}', space=vmem, size = 0x20000, scoped, tag = 'output window, operand 0, single buffered']
    %10 = vsyncpa [#allocation4], 0
    %11 = vsyncpa [#allocation6], 0
    %12 = vsyncpa [#allocation3], 0
    // Predicated region
    $region2: #{tpu_custom_call.1} parent=1 // pred_check
      _
    $region3: #{tpu_custom_call.1} parent=1 // pred_check_branch
      %14 = sbr.rel (0) target = $region5
    $region4: #{tpu_custom_call.1} parent=1 // pred_region
      _
    $region5: #{tpu_custom_call.1} parent=1 // pred_fallthru
      _
    // Predicated region
    $region6: #{tpu_custom_call.1} parent=1 // pred_check
      _
    $region7: #{tpu_custom_call.1} parent=1 // pred_check_branch
      %16 = sbr.rel (0) target = $region9
    $region8: #{tpu_custom_call.1} parent=1 // pred_region
      %s18 = ssub.s32 64, 64
      %19 = vsyncadd [#allocation4], %s18
      %s21 = sshll.u32 %s1, 4
      %s22 = int_to_ptr.vmem [resolvable:$true] %s21
      %24 = dma.vmem_to_smem %s22, 64, [#allocation2], [#allocation4]
    $region9: #{tpu_custom_call.1} parent=1 // pred_fallthru
      _
    // Predicated region
    $region10: #{tpu_custom_call.1} parent=1 // pred_check
      _
    $region11: #{tpu_custom_call.1} parent=1 // pred_check_branch
      %26 = sbr.rel (0) target = $region13
    $region12: #{tpu_custom_call.1} parent=1 // pred_region
      %s28 = ssub.s32 16, 16
      %29 = vsyncadd [#allocation6], %s28
      %s31 = sshll.u32 %s2, 4
      %s32 = int_to_ptr.vmem [resolvable:$true] %s31
      %34 = dma.vmem_to_smem %s32, 16, [#allocation5], [#allocation6]
    $region13: #{tpu_custom_call.1} parent=1 // pred_fallthru
      _
    // Predicated region
    $region14: #{tpu_custom_call.1} parent=1 // pred_check
      _
    $region15: #{tpu_custom_call.1} parent=1 // pred_check_branch
      %36 = sbr.rel (0) target = $region17
    $region16: #{tpu_custom_call.1} parent=1 // pred_region
      _
    $region17: #{tpu_custom_call.1} parent=1 // pred_fallthru
      _
    // Predicated region
    $region18: #{tpu_custom_call.1} parent=1 // pred_check
      _
    $region19: #{tpu_custom_call.1} parent=1 // pred_check_branch
      %38 = sbr.rel (0) target = $region21
    $region20: #{tpu_custom_call.1} parent=1 // pred_region
      _
    $region21: #{tpu_custom_call.1} parent=1 // pred_fallthru
      _
    // Predicated region
    $region22: #{tpu_custom_call.1} parent=1 // pred_check
      _
    $region23: #{tpu_custom_call.1} parent=1 // pred_check_branch
      %40 = sbr.rel (0) target = $region25
    $region24: #{tpu_custom_call.1} parent=1 // pred_region
      %41 = dma.done [#allocation4], 64
    $region25: #{tpu_custom_call.1} parent=1 // pred_fallthru
      _
    // Predicated region
    $region26: #{tpu_custom_call.1} parent=1 // pred_check
      _
    $region27: #{tpu_custom_call.1} parent=1 // pred_check_branch
      %43 = sbr.rel (0) target = $region29
    $region28: #{tpu_custom_call.1} parent=1 // pred_region
      %44 = dma.done [#allocation6], 16
    $region29: #{tpu_custom_call.1} parent=1 // pred_fallthru
      _
    %45 = sfence
    %v47 = vld [vmem:[%s0] sm:$0xff]
    %v48 = vld [vmem:[%s0 + $0x8] sm:$0xff]
    %v49 = vld [vmem:[%s0 + $0x10] sm:$0xff]
    %v50 = vld [vmem:[%s0 + $0x18] sm:$0xff]
    %v51 = vld [vmem:[%s0 + $0x20] sm:$0xff]
    %v52 = vld [vmem:[%s0 + $0x28] sm:$0xff]
    %v53 = vld [vmem:[%s0 + $0x30] sm:$0xff]
    %v54 = vld [vmem:[%s0 + $0x38] sm:$0xff]
    %v55 = vld [vmem:[%s0 + $0x40] sm:$0xff]
    %v56 = vld [vmem:[%s0 + $0x48] sm:$0xff]
    %v57 = vld [vmem:[%s0 + $0x50] sm:$0xff]
    %v58 = vld [vmem:[%s0 + $0x58] sm:$0xff]
    %v59 = vld [vmem:[%s0 + $0x60] sm:$0xff]
    %v60 = vld [vmem:[%s0 + $0x68] sm:$0xff]
    %v61 = vld [vmem:[%s0 + $0x70] sm:$0xff]
    %v62 = vld [vmem:[%s0 + $0x78] sm:$0xff]
    %v63 = vpack.c.bf16 %v48, %v47
    %v64 = vpack.c.bf16 %v50, %v49
    %v65 = vpack.c.bf16 %v52, %v51
    %v66 = vpack.c.bf16 %v54, %v53
    %v67 = vpack.c.bf16 %v56, %v55
    %v68 = vpack.c.bf16 %v58, %v57
    %v69 = vpack.c.bf16 %v60, %v59
    %v70 = vpack.c.bf16 %v62, %v61
    %v71 = vld [vmem:[%s3] sm:$0xf]
    %v72 = vld [vmem:[%s3 + $0x4] sm:$0xf]
    %v75 = vunpack.c.l.b16 %v71
    %v76 = vunpack.c.l.b16 %v72
    %v77 = vpack.c.b16 %v76, %v75
    %vm79 = vcmask 130048
    %v81 = vsel %vm79, %v63, 0
    %v84 = vsel %vm79, %v64, 0
    %v87 = vsel %vm79, %v65, 0
    %v90 = vsel %vm79, %v66, 0
    %v93 = vsel %vm79, %v67, 0
    %v96 = vsel %vm79, %v68, 0
    %v99 = vsel %vm79, %v69, 0
    %v102 = vsel %vm79, %v70, 0
    %104 = vmatprep.subr.bf16.mxu0 0
    %105 = vmatpush1.bf16.msra.mxu0 %v77
    %106 = vmatprep.subr.bf16.mxu0 0
    %107 = vmatpush1.bf16.msra.mxu0 0
    %108 = vmatprep.subr.bf16.mxu0 0
    %109 = vmatpush1.bf16.msra.mxu0 0
    %110 = vmatprep.subr.bf16.mxu0 0
    %111 = vmatpush1.bf16.msra.mxu0 0
    %112 = vmatprep.subr.bf16.mxu0 0
    %113 = vmatpush1.bf16.msra.mxu0 0
    %114 = vmatprep.subr.bf16.mxu0 0
    %115 = vmatpush1.bf16.msra.mxu0 0
    %116 = vmatprep.subr.bf16.mxu0 0
    %117 = vmatpush1.bf16.msra.mxu0 0
    %118 = vmatprep.subr.bf16.mxu0 0
    %119 = vmatpush1.bf16.msra.mxu0 0
    %120 = vmatprep.subr.bf16.mxu0 0
    %121 = vmatpush1.bf16.msra.mxu0 0
    %122 = vmatprep.subr.bf16.mxu0 0
    %123 = vmatpush1.bf16.msra.mxu0 0
    %124 = vmatprep.subr.bf16.mxu0 0
    %125 = vmatpush1.bf16.msra.mxu0 0
    %126 = vmatprep.subr.bf16.mxu0 0
    %127 = vmatpush1.bf16.msra.mxu0 0
    %128 = vmatprep.subr.bf16.mxu0 0
    %129 = vmatpush1.bf16.msra.mxu0 0
    %130 = vmatprep.subr.bf16.mxu0 0
    %131 = vmatpush1.bf16.msra.mxu0 0
    %132 = vmatprep.subr.bf16.mxu0 0
    %133 = vmatpush1.bf16.msra.mxu0 0
    %134 = vmatprep.subr.bf16.mxu0 0
    %135 = vmatpush1.bf16.msra.mxu0 0
    %136 = vmatprep.mubr.bf16.mxu0 0
    %137 = vmatmul.mubr.bf16.gmra.mrb[0].mxu0 %v81
    %v138 = vpop.f32.mrb[0].mxu0
    %v139 = vadd.f32 0.0, %v138
    %v140 = vpop.f32.mrb[0].mxu0
    %v141 = vpop.f32.mrb[0].mxu0
    %v142 = vadd.f32 0.0, %v141
    %v143 = vpop.f32.mrb[0].mxu0
    %144 = vmatprep.mubr.bf16.mxu0 0
    %145 = vmatmul.mubr.bf16.gmra.mrb[0].mxu0 %v84
    %v146 = vpop.f32.mrb[0].mxu0
    %v147 = vadd.f32 0.0, %v146
    %v148 = vpop.f32.mrb[0].mxu0
    %v149 = vpop.f32.mrb[0].mxu0
    %v150 = vadd.f32 0.0, %v149
    %v151 = vpop.f32.mrb[0].mxu0
    %152 = vmatprep.mubr.bf16.mxu0 0
    %153 = vmatmul.mubr.bf16.gmra.mrb[0].mxu0 %v87
    %v154 = vpop.f32.mrb[0].mxu0
    %v155 = vadd.f32 0.0, %v154
    %v156 = vpop.f32.mrb[0].mxu0
    %v157 = vpop.f32.mrb[0].mxu0
    %v158 = vadd.f32 0.0, %v157
    %v159 = vpop.f32.mrb[0].mxu0
    %160 = vmatprep.mubr.bf16.mxu0 0
    %161 = vmatmul.mubr.bf16.gmra.mrb[0].mxu0 %v90
    %v162 = vpop.f32.mrb[0].mxu0
    %v163 = vadd.f32 0.0, %v162
    %v164 = vpop.f32.mrb[0].mxu0
    %v165 = vpop.f32.mrb[0].mxu0
    %v166 = vadd.f32 0.0, %v165
    %v167 = vpop.f32.mrb[0].mxu0
    %168 = vmatprep.mubr.bf16.mxu0 0
    %169 = vmatmul.mubr.bf16.gmra.mrb[0].mxu0 %v93
    %v170 = vpop.f32.mrb[0].mxu0
    %v171 = vadd.f32 0.0, %v170
    %v172 = vpop.f32.mrb[0].mxu0
    %v173 = vpop.f32.mrb[0].mxu0
    %v174 = vadd.f32 0.0, %v173
    %v175 = vpop.f32.mrb[0].mxu0
    %176 = vmatprep.mubr.bf16.mxu0 0
    %177 = vmatmul.mubr.bf16.gmra.mrb[0].mxu0 %v96
    %v178 = vpop.f32.mrb[0].mxu0
    %v179 = vadd.f32 0.0, %v178
    %v180 = vpop.f32.mrb[0].mxu0
    %v181 = vpop.f32.mrb[0].mxu0
    %v182 = vadd.f32 0.0, %v181
    %v183 = vpop.f32.mrb[0].mxu0
    %184 = vmatprep.mubr.bf16.mxu0 0
    %185 = vmatmul.mubr.bf16.gmra.mrb[0].mxu0 %v99
    %v186 = vpop.f32.mrb[0].mxu0
    %v187 = vadd.f32 0.0, %v186
    %v188 = vpop.f32.mrb[0].mxu0
    %v189 = vpop.f32.mrb[0].mxu0
    %v190 = vadd.f32 0.0, %v189
    %v191 = vpop.f32.mrb[0].mxu0
    %192 = vmatprep.mubr.bf16.mxu0 0
    %193 = vmatmul.mubr.bf16.gmra.mrb[0].mxu0 %v102
    %v194 = vpop.f32.mrb[0].mxu0
    %v195 = vadd.f32 0.0, %v194
    %v196 = vpop.f32.mrb[0].mxu0
    %v197 = vpop.f32.mrb[0].mxu0
    %v198 = vadd.f32 0.0, %v197
    %v199 = vpop.f32.mrb[0].mxu0
    %200 = vdwg.mxu0
    %v201 = vld [vmem:[%s4] sm:$0xf]
    %v202 = vld [vmem:[%s4 + $0x4] sm:$0xf]
    %v203 = vld [vmem:[%s4 + $0x8] sm:$0xf]
    %v204 = vld [vmem:[%s4 + $0xc] sm:$0xf]
    %s205 = sld [smem:[#allocation2]]
    %v206 = vstv %s205
    %v207 = vmul.f32 %v139, %v206
    %v208 = vmul.f32 %v142, %v206
    %s209 = sld [smem:[#allocation2 + $0x1]]
    %v210 = vstv %s209
    %v211 = vmul.f32 %v147, %v210
    %v212 = vmul.f32 %v150, %v210
    %v213 = vadd.f32 %v207, %v211
    %v214 = vadd.f32 %v208, %v212
    %s215 = sld [smem:[#allocation2 + $0x2]]
    %v216 = vstv %s215
    %v217 = vmul.f32 %v155, %v216
    %v218 = vmul.f32 %v158, %v216
    %v219 = vadd.f32 %v213, %v217
    %v220 = vadd.f32 %v214, %v218
    %s221 = sld [smem:[#allocation2 + $0x3]]
    %v222 = vstv %s221
    %v223 = vmul.f32 %v163, %v222
    %v224 = vmul.f32 %v166, %v222
    %v225 = vadd.f32 %v219, %v223
    %v226 = vadd.f32 %v220, %v224
    %v227 = vpack.c.bf16 %v226, %v225
    %s228 = sld [smem:[#allocation5]]
    %v229 = vstv %s228
    %v234 = vunpack.c.l.b16 %v201
    %v235 = vunpack.c.l.b16 %v202
    %v236 = vunpack.c.l.b16 %v203
    %v237 = vunpack.c.l.b16 %v204
    %v238 = vpack.c.b16 %v235, %v234
    %v239 = vpack.c.b16 %v237, %v236
    %v241 = vsel %vm79, %v238, 0
    %v244 = vsel %vm79, %v239, 0
    %246 = vmatprep.subr.bf16.mxu0 0
    %247 = vmatpush1.bf16.msra.mxu0 %v227
    %248 = vmatprep.subr.bf16.mxu0 0
    %249 = vmatpush1.bf16.msra.mxu0 0
    %250 = vmatprep.subr.bf16.mxu0 0
    %251 = vmatpush1.bf16.msra.mxu0 0
    %252 = vmatprep.subr.bf16.mxu0 0
    %253 = vmatpush1.bf16.msra.mxu0 0
    %254 = vmatprep.subr.bf16.mxu0 0
    %255 = vmatpush1.bf16.msra.mxu0 0
    %256 = vmatprep.subr.bf16.mxu0 0
    %257 = vmatpush1.bf16.msra.mxu0 0
    %258 = vmatprep.subr.bf16.mxu0 0
    %259 = vmatpush1.bf16.msra.mxu0 0
    %260 = vmatprep.subr.bf16.mxu0 0
    %261 = vmatpush1.bf16.msra.mxu0 0
    %262 = vmatprep.subr.bf16.mxu0 0
    %263 = vmatpush1.bf16.msra.mxu0 0
    %264 = vmatprep.subr.bf16.mxu0 0
    %265 = vmatpush1.bf16.msra.mxu0 0
    %266 = vmatprep.subr.bf16.mxu0 0
    %267 = vmatpush1.bf16.msra.mxu0 0
    %268 = vmatprep.subr.bf16.mxu0 0
    %269 = vmatpush1.bf16.msra.mxu0 0
    %270 = vmatprep.subr.bf16.mxu0 0
    %271 = vmatpush1.bf16.msra.mxu0 0
    %272 = vmatprep.subr.bf16.mxu0 0
    %273 = vmatpush1.bf16.msra.mxu0 0
    %274 = vmatprep.subr.bf16.mxu0 0
    %275 = vmatpush1.bf16.msra.mxu0 0
    %276 = vmatprep.subr.bf16.mxu0 0
    %277 = vmatpush1.bf16.msra.mxu0 0
    %278 = vmatprep.mubr.bf16.mxu0 0
    %279 = vmatmul.mubr.bf16.gmra.mrb[0].mxu0 %v241
    %v280 = vpop.f32.mrb[0].mxu0
    %v281 = vadd.f32 %v229, %v280
    %v282 = vpop.f32.mrb[0].mxu0
    %v283 = vpop.f32.mrb[0].mxu0
    %v284 = vadd.f32 %v229, %v283
    %v285 = vpop.f32.mrb[0].mxu0
    %286 = vmatprep.mubr.bf16.mxu0 0
    %287 = vmatmul.mubr.bf16.gmra.mrb[0].mxu0 %v244
    %v288 = vpop.f32.mrb[0].mxu0
    %v289 = vadd.f32 %v229, %v288
    %v290 = vpop.f32.mrb[0].mxu0
    %v291 = vpop.f32.mrb[0].mxu0
    %v292 = vadd.f32 %v229, %v291
    %v293 = vpop.f32.mrb[0].mxu0
    %294 = vdwg.mxu0
    %vm295 = vcmask 261120
    %296 = vst.msk [vmem:[#allocation7] sm:$0xff] %vm295, %v281
    %297 = vst.msk [vmem:[#allocation7 + $0x8] sm:$0xff] %vm295, %v284
    %298 = vst.msk [vmem:[#allocation7 + $0x10] sm:$0xff] %vm295, %v289
    %299 = vst.msk [vmem:[#allocation7 + $0x18] sm:$0xff] %vm295, %v292
    %s300 = sld [smem:[#allocation2 + $0x80]]
    %v301 = vstv %s300
    %v302 = vmul.f32 %v139, %v301
    %v303 = vmul.f32 %v142, %v301
    %s304 = sld [smem:[#allocation2 + $0x81]]
    %v305 = vstv %s304
    %v306 = vmul.f32 %v147, %v305
    %v307 = vmul.f32 %v150, %v305
    %v308 = vadd.f32 %v302, %v306
    %v309 = vadd.f32 %v303, %v307
    %s310 = sld [smem:[#allocation2 + $0x82]]
    %v311 = vstv %s310
    %v312 = vmul.f32 %v155, %v311
    %v313 = vmul.f32 %v158, %v311
    %v314 = vadd.f32 %v308, %v312
    %v315 = vadd.f32 %v309, %v313
    %s316 = sld [smem:[#allocation2 + $0x83]]
    %v317 = vstv %s316
    %v318 = vmul.f32 %v163, %v317
    %v319 = vmul.f32 %v166, %v317
    %v320 = vadd.f32 %v314, %v318
    %v321 = vadd.f32 %v315, %v319
    %v322 = vpack.c.bf16 %v321, %v320
    %s323 = sld [smem:[#allocation5 + $0x1]]
    %v324 = vstv %s323
    %325 = vmatprep.subr.bf16.mxu0 0
    %326 = vmatpush1.bf16.msra.mxu0 %v322
    %327 = vmatprep.subr.bf16.mxu0 0
    %328 = vmatpush1.bf16.msra.mxu0 0
    %329 = vmatprep.subr.bf16.mxu0 0
    %330 = vmatpush1.bf16.msra.mxu0 0
    %331 = vmatprep.subr.bf16.mxu0 0
    %332 = vmatpush1.bf16.msra.mxu0 0
    %333 = vmatprep.subr.bf16.mxu0 0
    %334 = vmatpush1.bf16.msra.mxu0 0
    %335 = vmatprep.subr.bf16.mxu0 0
    %336 = vmatpush1.bf16.msra.mxu0 0
    %337 = vmatprep.subr.bf16.mxu0 0
    %338 = vmatpush1.bf16.msra.mxu0 0
    %339 = vmatprep.subr.bf16.mxu0 0
    %340 = vmatpush1.bf16.msra.mxu0 0
    %341 = vmatprep.subr.bf16.mxu0 0
    %342 = vmatpush1.bf16.msra.mxu0 0
    %343 = vmatprep.subr.bf16.mxu0 0
    %344 = vmatpush1.bf16.msra.mxu0 0
    %345 = vmatprep.subr.bf16.mxu0 0
    %346 = vmatpush1.bf16.msra.mxu0 0
    %347 = vmatprep.subr.bf16.mxu0 0
    %348 = vmatpush1.bf16.msra.mxu0 0
    %349 = vmatprep.subr.bf16.mxu0 0
    %350 = vmatpush1.bf16.msra.mxu0 0
    %351 = vmatprep.subr.bf16.mxu0 0
    %352 = vmatpush1.bf16.msra.mxu0 0
    %353 = vmatprep.subr.bf16.mxu0 0
    %354 = vmatpush1.bf16.msra.mxu0 0
    %355 = vmatprep.subr.bf16.mxu0 0
    %356 = vmatpush1.bf16.msra.mxu0 0
    %357 = vmatprep.mubr.bf16.mxu0 0
    %358 = vmatmul.mubr.bf16.gmra.mrb[0].mxu0 %v241
    %v359 = vpop.f32.mrb[0].mxu0
    %v360 = vadd.f32 %v324, %v359
    %v361 = vpop.f32.mrb[0].mxu0
    %v362 = vpop.f32.mrb[0].mxu0
    %v363 = vadd.f32 %v324, %v362
    %v364 = vpop.f32.mrb[0].mxu0
    %365 = vmatprep.mubr.bf16.mxu0 0
    %366 = vmatmul.mubr.bf16.gmra.mrb[0].mxu0 %v244
    %v367 = vpop.f32.mrb[0].mxu0
    %v368 = vadd.f32 %v324, %v367
    %v369 = vpop.f32.mrb[0].mxu0
    %v370 = vpop.f32.mrb[0].mxu0
    %v371 = vadd.f32 %v324, %v370
    %v372 = vpop.f32.mrb[0].mxu0
    %373 = vdwg.mxu0
    %s374 = scalar_lea.vmem [#allocation7], 32
    %375 = vst.msk [vmem:[%s374] sm:$0xff] %vm295, %v360
    %376 = vst.msk [vmem:[%s374 + $0x8] sm:$0xff] %vm295, %v363
    %377 = vst.msk [vmem:[%s374 + $0x10] sm:$0xff] %vm295, %v368
    %378 = vst.msk [vmem:[%s374 + $0x18] sm:$0xff] %vm295, %v371
    %s379 = sld [smem:[#allocation2 + $0x100]]
    %v380 = vstv %s379
    %v381 = vmul.f32 %v139, %v380
    %v382 = vmul.f32 %v142, %v380
    %s383 = sld [smem:[#allocation2 + $0x101]]
    %v384 = vstv %s383
    %v385 = vmul.f32 %v147, %v384
    %v386 = vmul.f32 %v150, %v384
    %v387 = vadd.f32 %v381, %v385
    %v388 = vadd.f32 %v382, %v386
    %s389 = sld [smem:[#allocation2 + $0x102]]
    %v390 = vstv %s389
    %v391 = vmul.f32 %v155, %v390
    %v392 = vmul.f32 %v158, %v390
    %v393 = vadd.f32 %v387, %v391
    %v394 = vadd.f32 %v388, %v392
    %s395 = sld [smem:[#allocation2 + $0x103]]
    %v396 = vstv %s395
    %v397 = vmul.f32 %v163, %v396
    %v398 = vmul.f32 %v166, %v396
    %v399 = vadd.f32 %v393, %v397
    %v400 = vadd.f32 %v394, %v398
    %v401 = vpack.c.bf16 %v400, %v399
    %s402 = sld [smem:[#allocation5 + $0x2]]
    %v403 = vstv %s402
    %404 = vmatprep.subr.bf16.mxu0 0
    %405 = vmatpush1.bf16.msra.mxu0 %v401
    %406 = vmatprep.subr.bf16.mxu0 0
    %407 = vmatpush1.bf16.msra.mxu0 0
    %408 = vmatprep.subr.bf16.mxu0 0
    %409 = vmatpush1.bf16.msra.mxu0 0
    %410 = vmatprep.subr.bf16.mxu0 0
    %411 = vmatpush1.bf16.msra.mxu0 0
    %412 = vmatprep.subr.bf16.mxu0 0
    %413 = vmatpush1.bf16.msra.mxu0 0
    %414 = vmatprep.subr.bf16.mxu0 0
    %415 = vmatpush1.bf16.msra.mxu0 0
    %416 = vmatprep.subr.bf16.mxu0 0
    %417 = vmatpush1.bf16.msra.mxu0 0
    %418 = vmatprep.subr.bf16.mxu0 0
    %419 = vmatpush1.bf16.msra.mxu0 0
    %420 = vmatprep.subr.bf16.mxu0 0
    %421 = vmatpush1.bf16.msra.mxu0 0
    %422 = vmatprep.subr.bf16.mxu0 0
    %423 = vmatpush1.bf16.msra.mxu0 0
    %424 = vmatprep.subr.bf16.mxu0 0
    %425 = vmatpush1.bf16.msra.mxu0 0
    %426 = vmatprep.subr.bf16.mxu0 0
    %427 = vmatpush1.bf16.msra.mxu0 0
    %428 = vmatprep.subr.bf16.mxu0 0
    %429 = vmatpush1.bf16.msra.mxu0 0
    %430 = vmatprep.subr.bf16.mxu0 0
    %431 = vmatpush1.bf16.msra.mxu0 0
    %432 = vmatprep.subr.bf16.mxu0 0
    %433 = vmatpush1.bf16.msra.mxu0 0
    %434 = vmatprep.subr.bf16.mxu0 0
    %435 = vmatpush1.bf16.msra.mxu0 0
    %436 = vmatprep.mubr.bf16.mxu0 0
    %437 = vmatmul.mubr.bf16.gmra.mrb[0].mxu0 %v241
    %v438 = vpop.f32.mrb[0].mxu0
    %v439 = vadd.f32 %v403, %v438
    %v440 = vpop.f32.mrb[0].mxu0
    %v441 = vpop.f32.mrb[0].mxu0
    %v442 = vadd.f32 %v403, %v441
    %v443 = vpop.f32.mrb[0].mxu0
    %444 = vmatprep.mubr.bf16.mxu0 0
    %445 = vmatmul.mubr.bf16.gmra.mrb[0].mxu0 %v244
    %v446 = vpop.f32.mrb[0].mxu0
    %v447 = vadd.f32 %v403, %v446
    %v448 = vpop.f32.mrb[0].mxu0
    %v449 = vpop.f32.mrb[0].mxu0
    %v450 = vadd.f32 %v403, %v449
    %v451 = vpop.f32.mrb[0].mxu0
    %452 = vdwg.mxu0
    %s453 = scalar_lea.vmem [#allocation7], 64
    %454 = vst.msk [vmem:[%s453] sm:$0xff] %vm295, %v439
    %455 = vst.msk [vmem:[%s453 + $0x8] sm:$0xff] %vm295, %v442
    %456 = vst.msk [vmem:[%s453 + $0x10] sm:$0xff] %vm295, %v447
    %457 = vst.msk [vmem:[%s453 + $0x18] sm:$0xff] %vm295, %v450
    %s458 = sld [smem:[#allocation2 + $0x180]]
    %v459 = vstv %s458
    %v460 = vmul.f32 %v139, %v459
    %v461 = vmul.f32 %v142, %v459
    %s462 = sld [smem:[#allocation2 + $0x181]]
    %v463 = vstv %s462
    %v464 = vmul.f32 %v147, %v463
    %v465 = vmul.f32 %v150, %v463
    %v466 = vadd.f32 %v460, %v464
    %v467 = vadd.f32 %v461, %v465
    %s468 = sld [smem:[#allocation2 + $0x182]]
    %v469 = vstv %s468
    %v470 = vmul.f32 %v155, %v469
    %v471 = vmul.f32 %v158, %v469
    %v472 = vadd.f32 %v466, %v470
    %v473 = vadd.f32 %v467, %v471
    %s474 = sld [smem:[#allocation2 + $0x183]]
    %v475 = vstv %s474
    %v476 = vmul.f32 %v163, %v475
    %v477 = vmul.f32 %v166, %v475
    %v478 = vadd.f32 %v472, %v476
    %v479 = vadd.f32 %v473, %v477
    %v480 = vpack.c.bf16 %v479, %v478
    %s481 = sld [smem:[#allocation5 + $0x3]]
    %v482 = vstv %s481
    %483 = vmatprep.subr.bf16.mxu0 0
    %484 = vmatpush1.bf16.msra.mxu0 %v480
    %485 = vmatprep.subr.bf16.mxu0 0
    %486 = vmatpush1.bf16.msra.mxu0 0
    %487 = vmatprep.subr.bf16.mxu0 0
    %488 = vmatpush1.bf16.msra.mxu0 0
    %489 = vmatprep.subr.bf16.mxu0 0
    %490 = vmatpush1.bf16.msra.mxu0 0
    %491 = vmatprep.subr.bf16.mxu0 0
    %492 = vmatpush1.bf16.msra.mxu0 0
    %493 = vmatprep.subr.bf16.mxu0 0
    %494 = vmatpush1.bf16.msra.mxu0 0
    %495 = vmatprep.subr.bf16.mxu0 0
    %496 = vmatpush1.bf16.msra.mxu0 0
    %497 = vmatprep.subr.bf16.mxu0 0
    %498 = vmatpush1.bf16.msra.mxu0 0
    %499 = vmatprep.subr.bf16.mxu0 0
    %500 = vmatpush1.bf16.msra.mxu0 0
    %501 = vmatprep.subr.bf16.mxu0 0
    %502 = vmatpush1.bf16.msra.mxu0 0
    %503 = vmatprep.subr.bf16.mxu0 0
    %504 = vmatpush1.bf16.msra.mxu0 0
    %505 = vmatprep.subr.bf16.mxu0 0
    %506 = vmatpush1.bf16.msra.mxu0 0
    %507 = vmatprep.subr.bf16.mxu0 0
    %508 = vmatpush1.bf16.msra.mxu0 0
    %509 = vmatprep.subr.bf16.mxu0 0
    %510 = vmatpush1.bf16.msra.mxu0 0
    %511 = vmatprep.subr.bf16.mxu0 0
    %512 = vmatpush1.bf16.msra.mxu0 0
    %513 = vmatprep.subr.bf16.mxu0 0
    %514 = vmatpush1.bf16.msra.mxu0 0
    %515 = vmatprep.mubr.bf16.mxu0 0
    %516 = vmatmul.mubr.bf16.gmra.mrb[0].mxu0 %v241
    %v517 = vpop.f32.mrb[0].mxu0
    %v518 = vadd.f32 %v482, %v517
    %v519 = vpop.f32.mrb[0].mxu0
    %v520 = vpop.f32.mrb[0].mxu0
    %v521 = vadd.f32 %v482, %v520
    %v522 = vpop.f32.mrb[0].mxu0
    %523 = vmatprep.mubr.bf16.mxu0 0
    %524 = vmatmul.mubr.bf16.gmra.mrb[0].mxu0 %v244
    %v525 = vpop.f32.mrb[0].mxu0
    %v526 = vadd.f32 %v482, %v525
    %v527 = vpop.f32.mrb[0].mxu0
    %v528 = vpop.f32.mrb[0].mxu0
    %v529 = vadd.f32 %v482, %v528
    %v530 = vpop.f32.mrb[0].mxu0
    %531 = vdwg.mxu0
    %s532 = scalar_lea.vmem [#allocation7], 96
    %533 = vst.msk [vmem:[%s532] sm:$0xff] %vm295, %v518
    %534 = vst.msk [vmem:[%s532 + $0x8] sm:$0xff] %vm295, %v521
    %535 = vst.msk [vmem:[%s532 + $0x10] sm:$0xff] %vm295, %v526
    %536 = vst.msk [vmem:[%s532 + $0x18] sm:$0xff] %vm295, %v529
    %s537 = sld [smem:[#allocation2]]
    %v538 = vstv %s537
    %v539 = vmul.f32 %v171, %v538
    %v540 = vmul.f32 %v174, %v538
    %s541 = sld [smem:[#allocation2 + $0x1]]
    %v542 = vstv %s541
    %v543 = vmul.f32 %v179, %v542
    %v544 = vmul.f32 %v182, %v542
    %v545 = vadd.f32 %v539, %v543
    %v546 = vadd.f32 %v540, %v544
    %s547 = sld [smem:[#allocation2 + $0x2]]
    %v548 = vstv %s547
    %v549 = vmul.f32 %v187, %v548
    %v550 = vmul.f32 %v190, %v548
    %v551 = vadd.f32 %v545, %v549
    %v552 = vadd.f32 %v546, %v550
    %s553 = sld [smem:[#allocation2 + $0x3]]
    %v554 = vstv %s553
    %v555 = vmul.f32 %v195, %v554
    %v556 = vmul.f32 %v198, %v554
    %v557 = vadd.f32 %v551, %v555
    %v558 = vadd.f32 %v552, %v556
    %v559 = vpack.c.bf16 %v558, %v557
    %s560 = sld [smem:[#allocation5]]
    %v561 = vstv %s560
    %562 = vmatprep.subr.bf16.mxu0 0
    %563 = vmatpush1.bf16.msra.mxu0 %v559
    %564 = vmatprep.subr.bf16.mxu0 0
    %565 = vmatpush1.bf16.msra.mxu0 0
    %566 = vmatprep.subr.bf16.mxu0 0
    %567 = vmatpush1.bf16.msra.mxu0 0
    %568 = vmatprep.subr.bf16.mxu0 0
    %569 = vmatpush1.bf16.msra.mxu0 0
    %570 = vmatprep.subr.bf16.mxu0 0
    %571 = vmatpush1.bf16.msra.mxu0 0
    %572 = vmatprep.subr.bf16.mxu0 0
    %573 = vmatpush1.bf16.msra.mxu0 0
    %574 = vmatprep.subr.bf16.mxu0 0
    %575 = vmatpush1.bf16.msra.mxu0 0
    %576 = vmatprep.subr.bf16.mxu0 0
    %577 = vmatpush1.bf16.msra.mxu0 0
    %578 = vmatprep.subr.bf16.mxu0 0
    %579 = vmatpush1.bf16.msra.mxu0 0
    %580 = vmatprep.subr.bf16.mxu0 0
    %581 = vmatpush1.bf16.msra.mxu0 0
    %582 = vmatprep.subr.bf16.mxu0 0
    %583 = vmatpush1.bf16.msra.mxu0 0
    %584 = vmatprep.subr.bf16.mxu0 0
    %585 = vmatpush1.bf16.msra.mxu0 0
    %586 = vmatprep.subr.bf16.mxu0 0
    %587 = vmatpush1.bf16.msra.mxu0 0
    %588 = vmatprep.subr.bf16.mxu0 0
    %589 = vmatpush1.bf16.msra.mxu0 0
    %590 = vmatprep.subr.bf16.mxu0 0
    %591 = vmatpush1.bf16.msra.mxu0 0
    %592 = vmatprep.subr.bf16.mxu0 0
    %593 = vmatpush1.bf16.msra.mxu0 0
    %594 = vmatprep.mubr.bf16.mxu0 0
    %595 = vmatmul.mubr.bf16.gmra.mrb[0].mxu0 %v241
    %v596 = vpop.f32.mrb[0].mxu0
    %v597 = vadd.f32 %v561, %v596
    %v598 = vpop.f32.mrb[0].mxu0
    %v599 = vpop.f32.mrb[0].mxu0
    %v600 = vadd.f32 %v561, %v599
    %v601 = vpop.f32.mrb[0].mxu0
    %602 = vmatprep.mubr.bf16.mxu0 0
    %603 = vmatmul.mubr.bf16.gmra.mrb[0].mxu0 %v244
    %v604 = vpop.f32.mrb[0].mxu0
    %v605 = vadd.f32 %v561, %v604
    %v606 = vpop.f32.mrb[0].mxu0
    %v607 = vpop.f32.mrb[0].mxu0
    %v608 = vadd.f32 %v561, %v607
    %v609 = vpop.f32.mrb[0].mxu0
    %610 = vdwg.mxu0
    %s611 = scalar_lea.vmem [#allocation7], 128
    %612 = vst.msk [vmem:[%s611] sm:$0xff] %vm295, %v597
    %613 = vst.msk [vmem:[%s611 + $0x8] sm:$0xff] %vm295, %v600
    %614 = vst.msk [vmem:[%s611 + $0x10] sm:$0xff] %vm295, %v605
    %615 = vst.msk [vmem:[%s611 + $0x18] sm:$0xff] %vm295, %v608
    %s616 = sld [smem:[#allocation2 + $0x80]]
    %v617 = vstv %s616
    %v618 = vmul.f32 %v171, %v617
    %v619 = vmul.f32 %v174, %v617
    %s620 = sld [smem:[#allocation2 + $0x81]]
    %v621 = vstv %s620
    %v622 = vmul.f32 %v179, %v621
    %v623 = vmul.f32 %v182, %v621
    %v624 = vadd.f32 %v618, %v622
    %v625 = vadd.f32 %v619, %v623
    %s626 = sld [smem:[#allocation2 + $0x82]]
    %v627 = vstv %s626
    %v628 = vmul.f32 %v187, %v627
    %v629 = vmul.f32 %v190, %v627
    %v630 = vadd.f32 %v624, %v628
    %v631 = vadd.f32 %v625, %v629
    %s632 = sld [smem:[#allocation2 + $0x83]]
    %v633 = vstv %s632
    %v634 = vmul.f32 %v195, %v633
    %v635 = vmul.f32 %v198, %v633
    %v636 = vadd.f32 %v630, %v634
    %v637 = vadd.f32 %v631, %v635
    %v638 = vpack.c.bf16 %v637, %v636
    %s639 = sld [smem:[#allocation5 + $0x1]]
    %v640 = vstv %s639
    %641 = vmatprep.subr.bf16.mxu0 0
    %642 = vmatpush1.bf16.msra.mxu0 %v638
    %643 = vmatprep.subr.bf16.mxu0 0
    %644 = vmatpush1.bf16.msra.mxu0 0
    %645 = vmatprep.subr.bf16.mxu0 0
    %646 = vmatpush1.bf16.msra.mxu0 0
    %647 = vmatprep.subr.bf16.mxu0 0
    %648 = vmatpush1.bf16.msra.mxu0 0
    %649 = vmatprep.subr.bf16.mxu0 0
    %650 = vmatpush1.bf16.msra.mxu0 0
    %651 = vmatprep.subr.bf16.mxu0 0
    %652 = vmatpush1.bf16.msra.mxu0 0
    %653 = vmatprep.subr.bf16.mxu0 0
    %654 = vmatpush1.bf16.msra.mxu0 0
    %655 = vmatprep.subr.bf16.mxu0 0
    %656 = vmatpush1.bf16.msra.mxu0 0
    %657 = vmatprep.subr.bf16.mxu0 0
    %658 = vmatpush1.bf16.msra.mxu0 0
    %659 = vmatprep.subr.bf16.mxu0 0
    %660 = vmatpush1.bf16.msra.mxu0 0
    %661 = vmatprep.subr.bf16.mxu0 0
    %662 = vmatpush1.bf16.msra.mxu0 0
    %663 = vmatprep.subr.bf16.mxu0 0
    %664 = vmatpush1.bf16.msra.mxu0 0
    %665 = vmatprep.subr.bf16.mxu0 0
    %666 = vmatpush1.bf16.msra.mxu0 0
    %667 = vmatprep.subr.bf16.mxu0 0
    %668 = vmatpush1.bf16.msra.mxu0 0
    %669 = vmatprep.subr.bf16.mxu0 0
    %670 = vmatpush1.bf16.msra.mxu0 0
    %671 = vmatprep.subr.bf16.mxu0 0
    %672 = vmatpush1.bf16.msra.mxu0 0
    %673 = vmatprep.mubr.bf16.mxu0 0
    %674 = vmatmul.mubr.bf16.gmra.mrb[0].mxu0 %v241
    %v675 = vpop.f32.mrb[0].mxu0
    %v676 = vadd.f32 %v640, %v675
    %v677 = vpop.f32.mrb[0].mxu0
    %v678 = vpop.f32.mrb[0].mxu0
    %v679 = vadd.f32 %v640, %v678
    %v680 = vpop.f32.mrb[0].mxu0
    %681 = vmatprep.mubr.bf16.mxu0 0
    %682 = vmatmul.mubr.bf16.gmra.mrb[0].mxu0 %v244
    %v683 = vpop.f32.mrb[0].mxu0
    %v684 = vadd.f32 %v640, %v683
    %v685 = vpop.f32.mrb[0].mxu0
    %v686 = vpop.f32.mrb[0].mxu0
    %v687 = vadd.f32 %v640, %v686
    %v688 = vpop.f32.mrb[0].mxu0
    %689 = vdwg.mxu0
    %s690 = scalar_lea.vmem [#allocation7], 160
    %691 = vst.msk [vmem:[%s690] sm:$0xff] %vm295, %v676
    %692 = vst.msk [vmem:[%s690 + $0x8] sm:$0xff] %vm295, %v679
    %693 = vst.msk [vmem:[%s690 + $0x10] sm:$0xff] %vm295, %v684
    %694 = vst.msk [vmem:[%s690 + $0x18] sm:$0xff] %vm295, %v687
    %s695 = sld [smem:[#allocation2 + $0x100]]
    %v696 = vstv %s695
    %v697 = vmul.f32 %v171, %v696
    %v698 = vmul.f32 %v174, %v696
    %s699 = sld [smem:[#allocation2 + $0x101]]
    %v700 = vstv %s699
    %v701 = vmul.f32 %v179, %v700
    %v702 = vmul.f32 %v182, %v700
    %v703 = vadd.f32 %v697, %v701
    %v704 = vadd.f32 %v698, %v702
    %s705 = sld [smem:[#allocation2 + $0x102]]
    %v706 = vstv %s705
    %v707 = vmul.f32 %v187, %v706
    %v708 = vmul.f32 %v190, %v706
    %v709 = vadd.f32 %v703, %v707
    %v710 = vadd.f32 %v704, %v708
    %s711 = sld [smem:[#allocation2 + $0x103]]
    %v712 = vstv %s711
    %v713 = vmul.f32 %v195, %v712
    %v714 = vmul.f32 %v198, %v712
    %v715 = vadd.f32 %v709, %v713
    %v716 = vadd.f32 %v710, %v714
    %v717 = vpack.c.bf16 %v716, %v715
    %s718 = sld [smem:[#allocation5 + $0x2]]
    %v719 = vstv %s718
    %720 = vmatprep.subr.bf16.mxu0 0
    %721 = vmatpush1.bf16.msra.mxu0 %v717
    %722 = vmatprep.subr.bf16.mxu0 0
    %723 = vmatpush1.bf16.msra.mxu0 0
    %724 = vmatprep.subr.bf16.mxu0 0
    %725 = vmatpush1.bf16.msra.mxu0 0
    %726 = vmatprep.subr.bf16.mxu0 0
    %727 = vmatpush1.bf16.msra.mxu0 0
    %728 = vmatprep.subr.bf16.mxu0 0
    %729 = vmatpush1.bf16.msra.mxu0 0
    %730 = vmatprep.subr.bf16.mxu0 0
    %731 = vmatpush1.bf16.msra.mxu0 0
    %732 = vmatprep.subr.bf16.mxu0 0
    %733 = vmatpush1.bf16.msra.mxu0 0
    %734 = vmatprep.subr.bf16.mxu0 0
    %735 = vmatpush1.bf16.msra.mxu0 0
    %736 = vmatprep.subr.bf16.mxu0 0
    %737 = vmatpush1.bf16.msra.mxu0 0
    %738 = vmatprep.subr.bf16.mxu0 0
    %739 = vmatpush1.bf16.msra.mxu0 0
    %740 = vmatprep.subr.bf16.mxu0 0
    %741 = vmatpush1.bf16.msra.mxu0 0
    %742 = vmatprep.subr.bf16.mxu0 0
    %743 = vmatpush1.bf16.msra.mxu0 0
    %744 = vmatprep.subr.bf16.mxu0 0
    %745 = vmatpush1.bf16.msra.mxu0 0
    %746 = vmatprep.subr.bf16.mxu0 0
    %747 = vmatpush1.bf16.msra.mxu0 0
    %748 = vmatprep.subr.bf16.mxu0 0
    %749 = vmatpush1.bf16.msra.mxu0 0
    %750 = vmatprep.subr.bf16.mxu0 0
    %751 = vmatpush1.bf16.msra.mxu0 0
    %752 = vmatprep.mubr.bf16.mxu0 0
    %753 = vmatmul.mubr.bf16.gmra.mrb[0].mxu0 %v241
    %v754 = vpop.f32.mrb[0].mxu0
    %v755 = vadd.f32 %v719, %v754
    %v756 = vpop.f32.mrb[0].mxu0
    %v757 = vpop.f32.mrb[0].mxu0
    %v758 = vadd.f32 %v719, %v757
    %v759 = vpop.f32.mrb[0].mxu0
    %760 = vmatprep.mubr.bf16.mxu0 0
    %761 = vmatmul.mubr.bf16.gmra.mrb[0].mxu0 %v244
    %v762 = vpop.f32.mrb[0].mxu0
    %v763 = vadd.f32 %v719, %v762
    %v764 = vpop.f32.mrb[0].mxu0
    %v765 = vpop.f32.mrb[0].mxu0
    %v766 = vadd.f32 %v719, %v765
    %v767 = vpop.f32.mrb[0].mxu0
    %768 = vdwg.mxu0
    %s769 = scalar_lea.vmem [#allocation7], 192
    %770 = vst.msk [vmem:[%s769] sm:$0xff] %vm295, %v755
    %771 = vst.msk [vmem:[%s769 + $0x8] sm:$0xff] %vm295, %v758
    %772 = vst.msk [vmem:[%s769 + $0x10] sm:$0xff] %vm295, %v763
    %773 = vst.msk [vmem:[%s769 + $0x18] sm:$0xff] %vm295, %v766
    %s774 = sld [smem:[#allocation2 + $0x180]]
    %v775 = vstv %s774
    %v776 = vmul.f32 %v171, %v775
    %v777 = vmul.f32 %v174, %v775
    %s778 = sld [smem:[#allocation2 + $0x181]]
    %v779 = vstv %s778
    %v780 = vmul.f32 %v179, %v779
    %v781 = vmul.f32 %v182, %v779
    %v782 = vadd.f32 %v776, %v780
    %v783 = vadd.f32 %v777, %v781
    %s784 = sld [smem:[#allocation2 + $0x182]]
    %v785 = vstv %s784
    %v786 = vmul.f32 %v187, %v785
    %v787 = vmul.f32 %v190, %v785
    %v788 = vadd.f32 %v782, %v786
    %v789 = vadd.f32 %v783, %v787
    %s790 = sld [smem:[#allocation2 + $0x183]]
    %v791 = vstv %s790
    %v792 = vmul.f32 %v195, %v791
    %v793 = vmul.f32 %v198, %v791
    %v794 = vadd.f32 %v788, %v792
    %v795 = vadd.f32 %v789, %v793
    %v796 = vpack.c.bf16 %v795, %v794
    %s797 = sld [smem:[#allocation5 + $0x3]]
    %v798 = vstv %s797
    %799 = vmatprep.subr.bf16.mxu0 0
    %800 = vmatpush1.bf16.msra.mxu0 %v796
    %801 = vmatprep.subr.bf16.mxu0 0
    %802 = vmatpush1.bf16.msra.mxu0 0
    %803 = vmatprep.subr.bf16.mxu0 0
    %804 = vmatpush1.bf16.msra.mxu0 0
    %805 = vmatprep.subr.bf16.mxu0 0
    %806 = vmatpush1.bf16.msra.mxu0 0
    %807 = vmatprep.subr.bf16.mxu0 0
    %808 = vmatpush1.bf16.msra.mxu0 0
    %809 = vmatprep.subr.bf16.mxu0 0
    %810 = vmatpush1.bf16.msra.mxu0 0
    %811 = vmatprep.subr.bf16.mxu0 0
    %812 = vmatpush1.bf16.msra.mxu0 0
    %813 = vmatprep.subr.bf16.mxu0 0
    %814 = vmatpush1.bf16.msra.mxu0 0
    %815 = vmatprep.subr.bf16.mxu0 0
    %816 = vmatpush1.bf16.msra.mxu0 0
    %817 = vmatprep.subr.bf16.mxu0 0
    %818 = vmatpush1.bf16.msra.mxu0 0
    %819 = vmatprep.subr.bf16.mxu0 0
    %820 = vmatpush1.bf16.msra.mxu0 0
    %821 = vmatprep.subr.bf16.mxu0 0
    %822 = vmatpush1.bf16.msra.mxu0 0
    %823 = vmatprep.subr.bf16.mxu0 0
    %824 = vmatpush1.bf16.msra.mxu0 0
    %825 = vmatprep.subr.bf16.mxu0 0
    %826 = vmatpush1.bf16.msra.mxu0 0
    %827 = vmatprep.subr.bf16.mxu0 0
    %828 = vmatpush1.bf16.msra.mxu0 0
    %829 = vmatprep.subr.bf16.mxu0 0
    %830 = vmatpush1.bf16.msra.mxu0 0
    %831 = vmatprep.mubr.bf16.mxu0 0
    %832 = vmatmul.mubr.bf16.gmra.mrb[0].mxu0 %v241
    %v833 = vpop.f32.mrb[0].mxu0
    %v834 = vadd.f32 %v798, %v833
    %v835 = vpop.f32.mrb[0].mxu0
    %v836 = vpop.f32.mrb[0].mxu0
    %v837 = vadd.f32 %v798, %v836
    %v838 = vpop.f32.mrb[0].mxu0
    %839 = vmatprep.mubr.bf16.mxu0 0
    %840 = vmatmul.mubr.bf16.gmra.mrb[0].mxu0 %v244
    %v841 = vpop.f32.mrb[0].mxu0
    %v842 = vadd.f32 %v798, %v841
    %v843 = vpop.f32.mrb[0].mxu0
    %v844 = vpop.f32.mrb[0].mxu0
    %v845 = vadd.f32 %v798, %v844
    %v846 = vpop.f32.mrb[0].mxu0
    %847 = vdwg.mxu0
    %s848 = scalar_lea.vmem [#allocation7], 224
    %849 = vst.msk [vmem:[%s848] sm:$0xff] %vm295, %v834
    %850 = vst.msk [vmem:[%s848 + $0x8] sm:$0xff] %vm295, %v837
    %851 = vst.msk [vmem:[%s848 + $0x10] sm:$0xff] %vm295, %v842
    %852 = vst.msk [vmem:[%s848 + $0x18] sm:$0xff] %vm295, %v845
    // Predicated region
    $region30: #{tpu_custom_call.1} parent=1 // pred_check
      _
    $region31: #{tpu_custom_call.1} parent=1 // pred_check_branch
      %854 = sbr.rel (0) target = $region33
    $region32: #{tpu_custom_call.1} parent=1 // pred_region
      %s856 = ssub.s32 4096, 4096
      %857 = vsyncadd [#allocation3], %s856
      %s858 = sshll.u32 [#allocation7], 4
      %s859 = int_to_ptr.vmem [resolvable:$true] %s858
      %864 = dma.vmem_to_hbm [thread:$0]  %s859, 4096, %s5, [#allocation3], 128, 128, 8
    $region33: #{tpu_custom_call.1} parent=1 // pred_fallthru
      _
    // Predicated region
    $region34: #{tpu_custom_call.1} parent=1 // pred_check
      _
    $region35: #{tpu_custom_call.1} parent=1 // pred_check_branch
      %866 = sbr.rel (0) target = $region37
    $region36: #{tpu_custom_call.1} parent=1 // pred_region
      %867 = dma.done [#allocation3], 4096
    $region37: #{tpu_custom_call.1} parent=1 // pred_fallthru
      _
    %868 = vsyncpa [#allocation3], 1
    %869 = vsyncpa [#allocation4], 1
    %870 = vsyncpa [#allocation6], 1

</llo_original>
